<compile_context>
chip_gen: v5e
topology: v5e:2x2
jax: 0.10.0
libtpu: 0.0.40
codegen_flags: <defaults>
</compile_context>

<pallas_src>
import functools
import math

import jax
import jax.numpy as jnp
from jax.experimental import pallas as pl
from jax.experimental.pallas import tpu as pltpu

# ~4 MiB per input/output block: large enough to hide the ~0.35 us per-grid-step
# overhead even at v7x's 3.2 TB/s HBM, small enough that double-buffered in+out
# blocks plus f32 intermediates stay inside the scoped-VMEM budget below.
_TARGET_BLOCK_BYTES = 4 * 1024 * 1024


def _lcm(a, b):
    return a * b // math.gcd(a, b)


def _sublane_multiple(dtype):
    # f32 -> 8, bf16/f16 -> 16, int8/fp8 -> 32 (keeps tiles sublane-dense).
    return max(8, 32 // jnp.dtype(dtype).itemsize)


def _vmem_limit_bytes():
    """Generation-aware scoped-VMEM request with headroom."""
    phys = 128 * 1024 * 1024
    try:
        info = pltpu.get_tpu_info()
        phys = int(getattr(info, "vmem_capacity_bytes", phys))
    except Exception:
        pass
    # 3/4 of physical, capped at 64 MiB: 48 MiB on v7x (64 MiB physical),
    # 64 MiB on v5e/v6e (128 MiB physical).
    return min(64 * 1024 * 1024, (phys * 3) // 4)


def _pick_row_tile(rows, row_bytes, sublane_mult):
    """Largest sublane-multiple row tile with a block of ~_TARGET_BLOCK_BYTES."""
    tr = _TARGET_BLOCK_BYTES // max(row_bytes, 1)
    tr = max(sublane_mult, (tr // sublane_mult) * sublane_mult)
    if tr >= rows:
        return rows                  # single full-extent block (any size allowed)
    return tr                        # partial last block is masked by Pallas


# ------------------------------ kernels -------------------------------------


def _ln_rows_kernel(x_ref, w_ref, b_ref, o_ref, *, eps):
    """LayerNorm over the last axis of a (TR, C) tile (C multiple of 128 / fallback)."""
    x = x_ref[...].astype(jnp.float32)
    mean = jnp.mean(x, axis=-1, keepdims=True)
    xc = x - mean
    var = jnp.mean(xc * xc, axis=-1, keepdims=True)      # biased, matches F.layer_norm
    inv = jax.lax.rsqrt(var + eps)
    w = w_ref[...].astype(jnp.float32)
    b = b_ref[...].astype(jnp.float32)
    o_ref[...] = (xc * (inv * w) + b).astype(o_ref.dtype)


def _ln_rows_packed_kernel(x_ref, w_ref, b_ref, o_ref, *, eps, num_seg, c):
    """LayerNorm where each row of the (TR, num_seg*C) tile packs `num_seg`
    independent groups of C channels along the lane axis (lane-dense DMAs)."""
    x = x_ref[...].astype(jnp.float32)                    # (TR, num_seg * C)
    w = w_ref[...].astype(jnp.float32)                    # (1, C) shared per segment
    b = b_ref[...].astype(jnp.float32)                    # (1, C)
    for s in range(num_seg):                              # small static unroll
        lo = s * c
        seg = x[:, lo:lo + c]                             # static lane slice
        mean = jnp.mean(seg, axis=-1, keepdims=True)
        xc = seg - mean
        var = jnp.mean(xc * xc, axis=-1, keepdims=True)
        inv = jax.lax.rsqrt(var + eps)
        o_ref[:, lo:lo + c] = (xc * (inv * w) + b).astype(o_ref.dtype)
    # TODO(synk): an MXU block-constant matmul segment-reduce would remove the
    # lane slices on v7x, but at packed widths >=256 the f32 matmul flops exceed
    # the HBM roofline (would turn a DMA-bound kernel compute-bound), so the
    # VPU/XLU path is kept.


def _ln_cfirst_kernel(x_ref, w_ref, b_ref, o_ref, *, eps):
    """LayerNorm over the channel (sublane) axis of a (C, TS) tile."""
    x = x_ref[...].astype(jnp.float32)                    # (C, TS)
    mean = jnp.mean(x, axis=0, keepdims=True)             # (1, TS)
    xc = x - mean
    var = jnp.mean(xc * xc, axis=0, keepdims=True)
    inv = jax.lax.rsqrt(var + eps)
    scale = inv * w_ref[...].astype(jnp.float32)          # (1,TS)*(C,1) -> (C,TS)
    o_ref[...] = (xc * scale + b_ref[...].astype(jnp.float32)).astype(o_ref.dtype)


# ------------------------------ wrappers ------------------------------------


def _layer_norm_last(x, weight, bias, eps):
    """LayerNorm over the last axis of x (channels_last), via Pallas."""
    orig_shape = x.shape
    C = orig_shape[-1]
    rows = math.prod(orig_shape[:-1]) if len(orig_shape) > 1 else 1
    itemsize = jnp.dtype(x.dtype).itemsize
    sub = _sublane_multiple(x.dtype)
    vmem_limit = _vmem_limit_bytes()

    w2 = weight.reshape(1, C)
    b2 = bias.reshape(1, C)

    # Lane packing: pack k = lcm(C,128)//C logical rows per physical row so the
    # packed width is a multiple of 128 (dense DMAs, unmasked stores).  Caps
    # keep the static unroll and vreg pressure bounded; outside the caps the
    # un-packed path wastes at most the last partial lane tile.
    pack = 1
    if C % 128 != 0:
        p = _lcm(C, 128) // C
        if p <= 32 and p * C <= 512:
            pack = p

    cost = pl.CostEstimate(
        flops=8 * rows * C,
        transcendentals=rows,
        bytes_accessed=2 * rows * C * itemsize,
    )
    # NOTE: "parallel" grid semantics let Mosaic shard the row axis across both
    # TensorCores on multi-TC parts (v7x); memory-bound LayerNorm needs both.
    cparams = pltpu.CompilerParams(
        dimension_semantics=("parallel",),
        vmem_limit_bytes=vmem_limit,
    )

    if pack > 1:
        P = pack * C
        pad = (-rows) % pack
        x2 = x.reshape(rows, C)
        if pad:
            # Rare tail case: pad a few rows instead of dropping the whole
            # tensor to the lane-sparse path (padded rows are sliced off).
            x2 = jnp.pad(x2, ((0, pad), (0, 0)))
        rows_p = (rows + pad) // pack
        x2 = x2.reshape(rows_p, P)                        # contiguous reinterpretation
        TR = _pick_row_tile(rows_p, P * itemsize, sub)
        grid = (pl.cdiv(rows_p, TR),)
        out = pl.pallas_call(
            functools.partial(_ln_rows_packed_kernel, eps=eps, num_seg=pack, c=C),
            out_shape=jax.ShapeDtypeStruct((rows_p, P), x.dtype),
            grid_spec=pltpu.PrefetchScalarGridSpec(
                num_scalar_prefetch=0,
                grid=grid,
                in_specs=[
                    pl.BlockSpec((TR, P), lambda i: (i, 0)),
                    pl.BlockSpec((1, C), lambda i: (0, 0)),
                    pl.BlockSpec((1, C), lambda i: (0, 0)),
                ],
                out_specs=pl.BlockSpec((TR, P), lambda i: (i, 0)),
            ),
            compiler_params=cparams,
            cost_estimate=cost,
        )(x2, w2, b2)
        out = out.reshape(rows_p * pack, C)
        if pad:
            out = out[:rows]
        return out.reshape(orig_shape)

    # Un-packed path (C a multiple of 128, or packing caps exceeded).
    x2 = x.reshape(rows, C)
    TR = _pick_row_tile(rows, C * itemsize, sub)
    grid = (pl.cdiv(rows, TR),)
    out = pl.pallas_call(
        functools.partial(_ln_rows_kernel, eps=eps),
        out_shape=jax.ShapeDtypeStruct((rows, C), x.dtype),
        grid_spec=pltpu.PrefetchScalarGridSpec(
            num_scalar_prefetch=0,
            grid=grid,
            in_specs=[
                pl.BlockSpec((TR, C), lambda i: (i, 0)),
                pl.BlockSpec((1, C), lambda i: (0, 0)),
                pl.BlockSpec((1, C), lambda i: (0, 0)),
            ],
            out_specs=pl.BlockSpec((TR, C), lambda i: (i, 0)),
        ),
        compiler_params=cparams,
        cost_estimate=cost,
    )(x2, w2, b2)
    return out.reshape(orig_shape)


def _layer_norm_cfirst(x, weight, bias, eps):
    """LayerNorm over axis 1 of x (channels_first), fully fused (no transpose)."""
    N, C = x.shape[0], x.shape[1]
    S = math.prod(x.shape[2:]) if len(x.shape) > 2 else 1
    itemsize = jnp.dtype(x.dtype).itemsize

    x3 = x.reshape(N, C, S)                               # collapse spatial dims (free)
    w2 = weight.reshape(C, 1)
    b2 = bias.reshape(C, 1)

    # Spatial tile: lane-dense multiple of 128, sized to the block budget using
    # the real itemsize.
    ts = _TARGET_BLOCK_BYTES // max(C * itemsize, 1)
    ts = max(128, (ts // 128) * 128)
    if ts >= S:
        ts = S                                            # full extent
    grid = (N, pl.cdiv(S, ts))

    cost = pl.CostEstimate(
        flops=8 * N * C * S,
        transcendentals=N * S,
        bytes_accessed=2 * N * C * S * itemsize,
    )
    out = pl.pallas_call(
        functools.partial(_ln_cfirst_kernel, eps=eps),
        out_shape=jax.ShapeDtypeStruct((N, C, S), x.dtype),
        grid_spec=pltpu.PrefetchScalarGridSpec(
            num_scalar_prefetch=0,
            grid=grid,
            in_specs=[
                pl.BlockSpec((None, C, ts), lambda n, s: (n, 0, s)),
                pl.BlockSpec((C, 1), lambda n, s: (0, 0)),
                pl.BlockSpec((C, 1), lambda n, s: (0, 0)),
            ],
            out_specs=pl.BlockSpec((None, C, ts), lambda n, s: (n, 0, s)),
        ),
        compiler_params=pltpu.CompilerParams(
            dimension_semantics=("parallel", "parallel"),
            vmem_limit_bytes=_vmem_limit_bytes(),
        ),
        cost_estimate=cost,
    )(x3, w2, b2)
    return out.reshape(x.shape)


def layer_norm(x, weight, bias, eps=1e-6, data_format="channels_last"):
    if data_format not in ("channels_last", "channels_first"):
        raise NotImplementedError
    if data_format == "channels_last":
        return _layer_norm_last(x, weight, bias, eps)
    return _layer_norm_cfirst(x, weight, bias, eps)


# ------------------------------ reference + demo ----------------------------


def _reference_layer_norm(x, weight, bias, eps, data_format):
    x = x.astype(jnp.float32)
    if data_format == "channels_last":
        u = jnp.mean(x, axis=-1, keepdims=True)
        s = jnp.mean((x - u) ** 2, axis=-1, keepdims=True)
        return (x - u) / jnp.sqrt(s + eps) * weight + bias
    u = jnp.mean(x, axis=1, keepdims=True)
    s = jnp.mean((x - u) ** 2, axis=1, keepdims=True)
    xn = (x - u) / jnp.sqrt(s + eps)
    wshape = (1, -1) + (1,) * (x.ndim - 2)
    return weight.reshape(wshape) * xn + bias.reshape(wshape)


if __name__ == "__main__":
    key = jax.random.PRNGKey(0)
    C = 32
    weight = jnp.ones((C,), jnp.float32) + 0.01 * jnp.arange(C, dtype=jnp.float32)
    bias = jnp.zeros((C,), jnp.float32) + 0.001 * jnp.arange(C, dtype=jnp.float32)

    k1, k2, k3, k4 = jax.random.split(key, 4)
    # channels_last (N, D, H, W, C): exercises the lane-packed kernel (pack=4)
    x_cl = jax.random.normal(k1, (2, 4, 4, 4, C), jnp.float32)
    # channels_first (N, C, D, H, W): exercises the sublane-reduce kernel
    x_cf = jax.random.normal(k2, (2, C, 4, 4, 4), jnp.float32)
    # C=48 (does not divide 128): generalized packing, pack=8 / width 384
    C2 = 48
    w2 = jnp.ones((C2,), jnp.float32) + 0.01 * jnp.arange(C2, dtype=jnp.float32)
    b2 = jnp.zeros((C2,), jnp.float32) + 0.001 * jnp.arange(C2, dtype=jnp.float32)
    x_cl2 = jax.random.normal(k3, (2, 3, 4, 4, C2), jnp.float32)
    # row count not divisible by pack: exercises the padded-tail path
    x_cl3 = jax.random.normal(k4, (1, 3, 5, C2), jnp.float32)
    # bf16 input: exercises dtype-aware tile sizing (stats still in f32)
    x_bf = x_cl.astype(jnp.bfloat16)

    y_cl = jax.block_until_ready(layer_norm(x_cl, weight, bias, 1e-6, "channels_last"))
    y_cf = jax.block_until_ready(layer_norm(x_cf, weight, bias, 1e-6, "channels_first"))
    y_cl2 = jax.block_until_ready(layer_norm(x_cl2, w2, b2, 1e-6, "channels_last"))
    y_cl3 = jax.block_until_ready(layer_norm(x_cl3, w2, b2, 1e-6, "channels_last"))
    y_bf = jax.block_until_ready(layer_norm(x_bf, weight, bias, 1e-6, "channels_last"))

    ref_cl = _reference_layer_norm(x_cl, weight, bias, 1e-6, "channels_last")
    ref_cf = _reference_layer_norm(x_cf, weight, bias, 1e-6, "channels_first")
    ref_cl2 = _reference_layer_norm(x_cl2, w2, b2, 1e-6, "channels_last")
    ref_cl3 = _reference_layer_norm(x_cl3, w2, b2, 1e-6, "channels_last")
    ref_bf = _reference_layer_norm(x_bf, weight, bias, 1e-6, "channels_last")

    assert jnp.allclose(y_cl, ref_cl, atol=1e-5, rtol=1e-5)
    assert jnp.allclose(y_cf, ref_cf, atol=1e-5, rtol=1e-5)
    assert jnp.allclose(y_cl2, ref_cl2, atol=1e-5, rtol=1e-5)
    assert jnp.allclose(y_cl3, ref_cl3, atol=1e-5, rtol=1e-5)
    assert jnp.allclose(y_bf.astype(jnp.float32), ref_bf, atol=3e-2, rtol=3e-2)

    print("KERNEL_OK")
</pallas_src>

<mosaic_0001>
module attributes {stable_mosaic.version = 11 : i64} {
  func.func @_ln_rows_packed_kernel(%arg0: i32, %arg1: memref<32x128xf32, #tpu.memory_space<vmem>>, %arg2: memref<1x32xf32, #tpu.memory_space<vmem>>, %arg3: memref<1x32xf32, #tpu.memory_space<vmem>>, %arg4: memref<32x128xf32, #tpu.memory_space<vmem>>) attributes {dimension_semantics = [#tpu.dimension_semantics<parallel>], iteration_bounds = array<i64: 1>, scalar_prefetch = 0 : i64, scratch_operands = 0 : i64, tpu.core_type = #tpu.core_type<tc>, window_params = [{transform_indices = @transform_0, window_bounds = array<i64: 32, 128>}, {pipeline_mode = #tpu.pipeline_mode<synchronous>, transform_indices = @transform_1, window_bounds = array<i64: 1, 32>}, {pipeline_mode = #tpu.pipeline_mode<synchronous>, transform_indices = @transform_2, window_bounds = array<i64: 1, 32>}, {transform_indices = @transform_3, window_bounds = array<i64: 32, 128>}]} {
    %c0 = arith.constant 0 : index
    %c0_0 = arith.constant 0 : index
    %0 = vector.load %arg1[%c0, %c0_0] : memref<32x128xf32, #tpu.memory_space<vmem>>, vector<32x128xf32>
    %c0_1 = arith.constant 0 : index
    %c0_2 = arith.constant 0 : index
    %1 = vector.load %arg2[%c0_1, %c0_2] : memref<1x32xf32, #tpu.memory_space<vmem>>, vector<1x32xf32>
    %c0_3 = arith.constant 0 : index
    %c0_4 = arith.constant 0 : index
    %2 = vector.load %arg3[%c0_3, %c0_4] : memref<1x32xf32, #tpu.memory_space<vmem>>, vector<1x32xf32>
    %3 = vector.extract_strided_slice %0 {offsets = [0, 0], sizes = [32, 32], strides = [1, 1]} : vector<32x128xf32> to vector<32x32xf32>
    %cst = arith.constant dense<0.000000e+00> : vector<32xf32>
    %4 = vector.multi_reduction <add>, %3, %cst [1] : vector<32x32xf32> to vector<32xf32>
    %5 = vector.shape_cast %4 : vector<32xf32> to vector<32x1xf32>
    %cst_5 = arith.constant 3.200000e+01 : f32
    %6 = vector.broadcast %cst_5 : f32 to vector<32x1xf32>
    %7 = arith.divf %5, %6 : vector<32x1xf32>
    %8 = vector.broadcast %7 : vector<32x1xf32> to vector<32x32xf32>
    %9 = arith.subf %3, %8 : vector<32x32xf32>
    %10 = arith.mulf %9, %9 : vector<32x32xf32>
    %cst_6 = arith.constant dense<0.000000e+00> : vector<32xf32>
    %11 = vector.multi_reduction <add>, %10, %cst_6 [1] : vector<32x32xf32> to vector<32xf32>
    %12 = vector.shape_cast %11 : vector<32xf32> to vector<32x1xf32>
    %cst_7 = arith.constant 3.200000e+01 : f32
    %13 = vector.broadcast %cst_7 : f32 to vector<32x1xf32>
    %14 = arith.divf %12, %13 : vector<32x1xf32>
    %cst_8 = arith.constant 9.99999997E-7 : f32
    %15 = vector.broadcast %cst_8 : f32 to vector<32x1xf32>
    %16 = arith.addf %14, %15 : vector<32x1xf32>
    %17 = math.rsqrt %16 : vector<32x1xf32>
    %18 = vector.broadcast %17 : vector<32x1xf32> to vector<32x32xf32>
    %19 = vector.broadcast %1 : vector<1x32xf32> to vector<32x32xf32>
    %20 = arith.mulf %18, %19 : vector<32x32xf32>
    %21 = arith.mulf %9, %20 : vector<32x32xf32>
    %22 = vector.broadcast %2 : vector<1x32xf32> to vector<32x32xf32>
    %23 = arith.addf %21, %22 : vector<32x32xf32>
    %c0_9 = arith.constant 0 : index
    %c0_10 = arith.constant 0 : index
    %24 = vector.load %arg4[%c0_9, %c0_10] : memref<32x128xf32, #tpu.memory_space<vmem>>, vector<32x32xf32>
    tpu.vector_store %arg4[%c0_9, %c0_10], %23 {strides = array<i32>} : memref<32x128xf32, #tpu.memory_space<vmem>>, vector<32x32xf32>,
    %25 = vector.extract_strided_slice %0 {offsets = [0, 32], sizes = [32, 32], strides = [1, 1]} : vector<32x128xf32> to vector<32x32xf32>
    %cst_11 = arith.constant dense<0.000000e+00> : vector<32xf32>
    %26 = vector.multi_reduction <add>, %25, %cst_11 [1] : vector<32x32xf32> to vector<32xf32>
    %27 = vector.shape_cast %26 : vector<32xf32> to vector<32x1xf32>
    %cst_12 = arith.constant 3.200000e+01 : f32
    %28 = vector.broadcast %cst_12 : f32 to vector<32x1xf32>
    %29 = arith.divf %27, %28 : vector<32x1xf32>
    %30 = vector.broadcast %29 : vector<32x1xf32> to vector<32x32xf32>
    %31 = arith.subf %25, %30 : vector<32x32xf32>
    %32 = arith.mulf %31, %31 : vector<32x32xf32>
    %cst_13 = arith.constant dense<0.000000e+00> : vector<32xf32>
    %33 = vector.multi_reduction <add>, %32, %cst_13 [1] : vector<32x32xf32> to vector<32xf32>
    %34 = vector.shape_cast %33 : vector<32xf32> to vector<32x1xf32>
    %cst_14 = arith.constant 3.200000e+01 : f32
    %35 = vector.broadcast %cst_14 : f32 to vector<32x1xf32>
    %36 = arith.divf %34, %35 : vector<32x1xf32>
    %cst_15 = arith.constant 9.99999997E-7 : f32
    %37 = vector.broadcast %cst_15 : f32 to vector<32x1xf32>
    %38 = arith.addf %36, %37 : vector<32x1xf32>
    %39 = math.rsqrt %38 : vector<32x1xf32>
    %40 = vector.broadcast %39 : vector<32x1xf32> to vector<32x32xf32>
    %41 = vector.broadcast %1 : vector<1x32xf32> to vector<32x32xf32>
    %42 = arith.mulf %40, %41 : vector<32x32xf32>
    %43 = arith.mulf %31, %42 : vector<32x32xf32>
    %44 = vector.broadcast %2 : vector<1x32xf32> to vector<32x32xf32>
    %45 = arith.addf %43, %44 : vector<32x32xf32>
    %c0_16 = arith.constant 0 : index
    %c32 = arith.constant 32 : index
    %46 = vector.load %arg4[%c0_16, %c32] : memref<32x128xf32, #tpu.memory_space<vmem>>, vector<32x32xf32>
    tpu.vector_store %arg4[%c0_16, %c32], %45 {strides = array<i32>} : memref<32x128xf32, #tpu.memory_space<vmem>>, vector<32x32xf32>,
    %47 = vector.extract_strided_slice %0 {offsets = [0, 64], sizes = [32, 32], strides = [1, 1]} : vector<32x128xf32> to vector<32x32xf32>
    %cst_17 = arith.constant dense<0.000000e+00> : vector<32xf32>
    %48 = vector.multi_reduction <add>, %47, %cst_17 [1] : vector<32x32xf32> to vector<32xf32>
    %49 = vector.shape_cast %48 : vector<32xf32> to vector<32x1xf32>
    %cst_18 = arith.constant 3.200000e+01 : f32
    %50 = vector.broadcast %cst_18 : f32 to vector<32x1xf32>
    %51 = arith.divf %49, %50 : vector<32x1xf32>
    %52 = vector.broadcast %51 : vector<32x1xf32> to vector<32x32xf32>
    %53 = arith.subf %47, %52 : vector<32x32xf32>
    %54 = arith.mulf %53, %53 : vector<32x32xf32>
    %cst_19 = arith.constant dense<0.000000e+00> : vector<32xf32>
    %55 = vector.multi_reduction <add>, %54, %cst_19 [1] : vector<32x32xf32> to vector<32xf32>
    %56 = vector.shape_cast %55 : vector<32xf32> to vector<32x1xf32>
    %cst_20 = arith.constant 3.200000e+01 : f32
    %57 = vector.broadcast %cst_20 : f32 to vector<32x1xf32>
    %58 = arith.divf %56, %57 : vector<32x1xf32>
    %cst_21 = arith.constant 9.99999997E-7 : f32
    %59 = vector.broadcast %cst_21 : f32 to vector<32x1xf32>
    %60 = arith.addf %58, %59 : vector<32x1xf32>
    %61 = math.rsqrt %60 : vector<32x1xf32>
    %62 = vector.broadcast %61 : vector<32x1xf32> to vector<32x32xf32>
    %63 = vector.broadcast %1 : vector<1x32xf32> to vector<32x32xf32>
    %64 = arith.mulf %62, %63 : vector<32x32xf32>
    %65 = arith.mulf %53, %64 : vector<32x32xf32>
    %66 = vector.broadcast %2 : vector<1x32xf32> to vector<32x32xf32>
    %67 = arith.addf %65, %66 : vector<32x32xf32>
    %c0_22 = arith.constant 0 : index
    %c64 = arith.constant 64 : index
    %68 = vector.load %arg4[%c0_22, %c64] : memref<32x128xf32, #tpu.memory_space<vmem>>, vector<32x32xf32>
    tpu.vector_store %arg4[%c0_22, %c64], %67 {strides = array<i32>} : memref<32x128xf32, #tpu.memory_space<vmem>>, vector<32x32xf32>,
    %69 = vector.extract_strided_slice %0 {offsets = [0, 96], sizes = [32, 32], strides = [1, 1]} : vector<32x128xf32> to vector<32x32xf32>
    %cst_23 = arith.constant dense<0.000000e+00> : vector<32xf32>
    %70 = vector.multi_reduction <add>, %69, %cst_23 [1] : vector<32x32xf32> to vector<32xf32>
    %71 = vector.shape_cast %70 : vector<32xf32> to vector<32x1xf32>
    %cst_24 = arith.constant 3.200000e+01 : f32
    %72 = vector.broadcast %cst_24 : f32 to vector<32x1xf32>
    %73 = arith.divf %71, %72 : vector<32x1xf32>
    %74 = vector.broadcast %73 : vector<32x1xf32> to vector<32x32xf32>
    %75 = arith.subf %69, %74 : vector<32x32xf32>
    %76 = arith.mulf %75, %75 : vector<32x32xf32>
    %cst_25 = arith.constant dense<0.000000e+00> : vector<32xf32>
    %77 = vector.multi_reduction <add>, %76, %cst_25 [1] : vector<32x32xf32> to vector<32xf32>
    %78 = vector.shape_cast %77 : vector<32xf32> to vector<32x1xf32>
    %cst_26 = arith.constant 3.200000e+01 : f32
    %79 = vector.broadcast %cst_26 : f32 to vector<32x1xf32>
    %80 = arith.divf %78, %79 : vector<32x1xf32>
    %cst_27 = arith.constant 9.99999997E-7 : f32
    %81 = vector.broadcast %cst_27 : f32 to vector<32x1xf32>
    %82 = arith.addf %80, %81 : vector<32x1xf32>
    %83 = math.rsqrt %82 : vector<32x1xf32>
    %84 = vector.broadcast %83 : vector<32x1xf32> to vector<32x32xf32>
    %85 = vector.broadcast %1 : vector<1x32xf32> to vector<32x32xf32>
    %86 = arith.mulf %84, %85 : vector<32x32xf32>
    %87 = arith.mulf %75, %86 : vector<32x32xf32>
    %88 = vector.broadcast %2 : vector<1x32xf32> to vector<32x32xf32>
    %89 = arith.addf %87, %88 : vector<32x32xf32>
    %c0_28 = arith.constant 0 : index
    %c96 = arith.constant 96 : index
    %90 = vector.load %arg4[%c0_28, %c96] : memref<32x128xf32, #tpu.memory_space<vmem>>, vector<32x32xf32>
    tpu.vector_store %arg4[%c0_28, %c96], %89 {strides = array<i32>} : memref<32x128xf32, #tpu.memory_space<vmem>>, vector<32x32xf32>,
    return
  }
  func.func @transform_0(%arg0: i32) -> (i32, i32) {
    %c0_i32 = arith.constant 0 : i32
    %c0_i32_0 = arith.constant 0 : i32
    return %arg0, %c0_i32 : i32, i32
  }
  func.func @transform_1(%arg0: i32) -> (i32, i32) {
    %c0_i32 = arith.constant 0 : i32
    %c0_i32_0 = arith.constant 0 : i32
    %c0_i32_1 = arith.constant 0 : i32
    return %c0_i32, %c0_i32_0 : i32, i32
  }
  func.func @transform_2(%arg0: i32) -> (i32, i32) {
    %c0_i32 = arith.constant 0 : i32
    %c0_i32_0 = arith.constant 0 : i32
    %c0_i32_1 = arith.constant 0 : i32
    return %c0_i32, %c0_i32_0 : i32, i32
  }
  func.func @transform_3(%arg0: i32) -> (i32, i32) {
    %c0_i32 = arith.constant 0 : i32
    %c0_i32_0 = arith.constant 0 : i32
    return %arg0, %c0_i32 : i32, i32
  }
}

</mosaic_0001>

<llo_original>
// kernel: tpu_custom_call.1
$region0: #{tpu_custom_call.1}
  #allocation0 [shape = 'u32[]', space=smem, size = 0x4, offset = 0x4, fixed_abs, tag = 'smem constant byte address 0x4 - core index']
  #allocation1 [shape = 'u32[72,128]{1,0:T(1,128)}', space=vmem, size = 0x9000, scoped, tag = 'internal scratch']
  %s0 = inlined_call_operand.hbm [shape: f32[32,128], index: 0, kind: input, shape index: {}]
  %s1 = inlined_call_operand.hbm [shape: f32[1,32], index: 1, kind: input, shape index: {}]
  %s2 = inlined_call_operand.vmem [shape: f32[1,32], index: 2, kind: input, shape index: {}]
  %s3 = inlined_call_operand.hbm [shape: f32[32,128], index: 3, kind: output, shape index: {}]
  %s4 = sld [smem:[#allocation0]]
  $region30: #{tpu_custom_call.1} parent=0
    _
  %s6 = ssub.s32 1, %s4
  %s7 = scalar_select 0, %s6, %s4
  $region1: #{tpu_custom_call.1} parent=0
    #allocation2 [shape = 'u8[16384]{0}', space=vmem, size = 0x4000, scoped, tag = 'input window, operand 0, single buffered']
    #allocation3 [shape = 's32[1]{0}', space=sflag, size = 0x4, scoped, tag = 'scoped memory for tpu_custom_call.1']
    #allocation4 [shape = 's32[1]{0}', space=sflag, size = 0x4, scoped, tag = 'scoped memory for tpu_custom_call.1']
    #allocation5 [shape = 'u8[512]{0}', space=vmem, size = 0x400, scoped, tag = 'input window, operand 1, single buffered']
    #allocation6 [shape = 's32[1]{0}', space=sflag, size = 0x4, scoped, tag = 'scoped memory for tpu_custom_call.1']
    #allocation7 [shape = 'u8[16384]{0}', space=vmem, size = 0x4000, scoped, tag = 'output window, operand 0, single buffered']
    %8 = vsyncpa [#allocation3], 0
    %9 = vsyncpa [#allocation6], 0
    %10 = vsyncpa [#allocation4], 0
    // Predicated region
    $region2: #{tpu_custom_call.1} parent=1 // pred_check
      _
    $region3: #{tpu_custom_call.1} parent=1 // pred_check_branch
      %12 = sbr.rel (0) target = $region5
    $region4: #{tpu_custom_call.1} parent=1 // pred_region
      %14 = vsyncadd [#allocation3], 0
      %s15 = sshll.u32 %s0, 4
      %s16 = int_to_ptr.hbm [resolvable:$true] %s15
      %s17 = sshll.u32 [#allocation2], 4
      %s18 = int_to_ptr.vmem [resolvable:$true] %s17
      %23 = dma.hbm_to_vmem [thread:$0]  %s16, 512, %s18, [#allocation3], 128, 128, 8
    $region5: #{tpu_custom_call.1} parent=1 // pred_fallthru
      _
    // Predicated region
    $region6: #{tpu_custom_call.1} parent=1 // pred_check
      _
    $region7: #{tpu_custom_call.1} parent=1 // pred_check_branch
      %25 = sbr.rel (0) target = $region9
    $region8: #{tpu_custom_call.1} parent=1 // pred_region
      %27 = vsyncadd [#allocation6], 0
      %s29 = sshll.u32 %s1, 4
      %s30 = int_to_ptr.hbm [resolvable:$true] %s29
      %s31 = sshll.u32 [#allocation5], 4
      %s32 = int_to_ptr.vmem [resolvable:$true] %s31
      %34 = dma.hbm_to_vmem [thread:$0]  %s30, 16, %s32, [#allocation6]
    $region9: #{tpu_custom_call.1} parent=1 // pred_fallthru
      _
    // Predicated region
    $region10: #{tpu_custom_call.1} parent=1 // pred_check
      _
    $region11: #{tpu_custom_call.1} parent=1 // pred_check_branch
      %36 = sbr.rel (0) target = $region13
    $region12: #{tpu_custom_call.1} parent=1 // pred_region
      _
    $region13: #{tpu_custom_call.1} parent=1 // pred_fallthru
      _
    // Predicated region
    $region14: #{tpu_custom_call.1} parent=1 // pred_check
      _
    $region15: #{tpu_custom_call.1} parent=1 // pred_check_branch
      %38 = sbr.rel (0) target = $region17
    $region16: #{tpu_custom_call.1} parent=1 // pred_region
      %40 = dma.done [#allocation3], 512
    $region17: #{tpu_custom_call.1} parent=1 // pred_fallthru
      _
    // Predicated region
    $region18: #{tpu_custom_call.1} parent=1 // pred_check
      _
    $region19: #{tpu_custom_call.1} parent=1 // pred_check_branch
      %42 = sbr.rel (0) target = $region21
    $region20: #{tpu_custom_call.1} parent=1 // pred_region
      %44 = dma.done [#allocation6], 16
    $region21: #{tpu_custom_call.1} parent=1 // pred_fallthru
      _
    %v45 = vld [vmem:[#allocation2] sm:$0xff]
    %v46 = vld [vmem:[#allocation2 + $0x8] sm:$0xff]
    %v47 = vld [vmem:[#allocation2 + $0x10] sm:$0xff]
    %v48 = vld [vmem:[#allocation2 + $0x18] sm:$0xff]
    %v49 = vld [vmem:[#allocation5] sm:$0x1]
    %v50 = vld [vmem:[%s2] sm:$0x1]
    %vm51 = vcmask 261120
    %v52 = vsel %vm51, %v45, 0.0
    %53 = vadd.xlane.f32.xlu0 %v52
    %v54 = vpop.xlane.xlu0 %53
    %v55 = vsel %vm51, %v46, 0.0
    %56 = vadd.xlane.f32.xlu0 %v55
    %v57 = vpop.xlane.xlu0 %56
    %v58 = vsel %vm51, %v47, 0.0
    %59 = vadd.xlane.f32.xlu0 %v58
    %v60 = vpop.xlane.xlu0 %59
    %v61 = vsel %vm51, %v48, 0.0
    %62 = vadd.xlane.f32.xlu0 %v61
    %v63 = vpop.xlane.xlu0 %62
    %v64 = vrcp.pop 32.0
    %v65 = vmul.f32 32.0, %v64
    %v66 = vsub.f32 1.0, %v65
    %v67 = vmul.f32 %v64, %v66
    %v68 = vadd.f32 %v64, %v67
    %vm69 = vweird.f32 %v64
    %v70 = vsel %vm69, %v64, %v68
    %v71 = vmul.f32 %v54, %v70
    %v72 = vmul.f32 %v57, %v70
    %v73 = vmul.f32 %v60, %v70
    %v74 = vmul.f32 %v63, %v70
    %v75 = vsub.f32 %v45, %v71
    %v76 = vsub.f32 %v46, %v72
    %v77 = vsub.f32 %v47, %v73
    %v78 = vsub.f32 %v48, %v74
    %v79 = vmul.f32 %v75, %v75
    %v80 = vmul.f32 %v76, %v76
    %v81 = vmul.f32 %v77, %v77
    %v82 = vmul.f32 %v78, %v78
    %v83 = vsel %vm51, %v79, 0.0
    %84 = vadd.xlane.f32.xlu0 %v83
    %v85 = vpop.xlane.xlu0 %84
    %v86 = vsel %vm51, %v80, 0.0
    %87 = vadd.xlane.f32.xlu0 %v86
    %v88 = vpop.xlane.xlu0 %87
    %v89 = vsel %vm51, %v81, 0.0
    %90 = vadd.xlane.f32.xlu0 %v89
    %v91 = vpop.xlane.xlu0 %90
    %v92 = vsel %vm51, %v82, 0.0
    %93 = vadd.xlane.f32.xlu0 %v92
    %v94 = vpop.xlane.xlu0 %93
    %v95 = vmul.f32 %v85, %v70
    %v96 = vmul.f32 %v88, %v70
    %v97 = vmul.f32 %v91, %v70
    %v98 = vmul.f32 %v94, %v70
    %v99 = vadd.f32 %v95, 1e-06
    %v100 = vadd.f32 %v96, 1e-06
    %v101 = vadd.f32 %v97, 1e-06
    %v102 = vadd.f32 %v98, 1e-06
    %v103 = vrsqrt.pop %v99
    %v104 = vmul.f32 %v103, %v99
    %v105 = vmul.f32 %v104, %v103
    %v106 = vmul.f32 0.5, %v105
    %v107 = vsub.f32 1.5, %v106
    %v108 = vmul.f32 %v103, %v107
    %vm109 = vweird.f32 %v99
    %vm110 = vweird.f32 %v103
    %vm111 = vmor %vm109, %vm110
    %v112 = vsel %vm111, %v103, %v108
    %v113 = vrsqrt.pop %v100
    %v114 = vmul.f32 %v113, %v100
    %v115 = vmul.f32 %v114, %v113
    %v116 = vmul.f32 0.5, %v115
    %v117 = vsub.f32 1.5, %v116
    %v118 = vmul.f32 %v113, %v117
    %vm119 = vweird.f32 %v100
    %vm120 = vweird.f32 %v113
    %vm121 = vmor %vm119, %vm120
    %v122 = vsel %vm121, %v113, %v118
    %v123 = vrsqrt.pop %v101
    %v124 = vmul.f32 %v123, %v101
    %v125 = vmul.f32 %v124, %v123
    %v126 = vmul.f32 0.5, %v125
    %v127 = vsub.f32 1.5, %v126
    %v128 = vmul.f32 %v123, %v127
    %vm129 = vweird.f32 %v101
    %vm130 = vweird.f32 %v123
    %vm131 = vmor %vm129, %vm130
    %v132 = vsel %vm131, %v123, %v128
    %v133 = vrsqrt.pop %v102
    %v134 = vmul.f32 %v133, %v102
    %v135 = vmul.f32 %v134, %v133
    %v136 = vmul.f32 0.5, %v135
    %v137 = vsub.f32 1.5, %v136
    %v138 = vmul.f32 %v133, %v137
    %vm139 = vweird.f32 %v102
    %vm140 = vweird.f32 %v133
    %vm141 = vmor %vm139, %vm140
    %v142 = vsel %vm141, %v133, %v138
    %v144 = vperm.slane %v49, 0
    %v146 = vmul.f32 %v112, %v144
    %v147 = vmul.f32 %v122, %v144
    %v148 = vmul.f32 %v132, %v144
    %v149 = vmul.f32 %v142, %v144
    %v150 = vmul.f32 %v75, %v146
    %v151 = vmul.f32 %v76, %v147
    %v152 = vmul.f32 %v77, %v148
    %v153 = vmul.f32 %v78, %v149
    %v155 = vperm.slane %v50, 0
    %v157 = vadd.f32 %v150, %v155
    %v158 = vadd.f32 %v151, %v155
    %v159 = vadd.f32 %v152, %v155
    %v160 = vadd.f32 %v153, %v155
    %161 = vst.msk [vmem:[#allocation7] sm:$0xff] %vm51, %v157
    %162 = vst.msk [vmem:[#allocation7 + $0x8] sm:$0xff] %vm51, %v158
    %163 = vst.msk [vmem:[#allocation7 + $0x10] sm:$0xff] %vm51, %v159
    %164 = vst.msk [vmem:[#allocation7 + $0x18] sm:$0xff] %vm51, %v160
    %169 = vrot.lane.b32.xlu0 %v45, 96
    %v170 = vpop.permute.xlu0 %169
    %171 = vrot.lane.b32.xlu0 %v46, 96
    %v172 = vpop.permute.xlu0 %171
    %173 = vrot.lane.b32.xlu0 %v47, 96
    %v174 = vpop.permute.xlu0 %173
    %175 = vrot.lane.b32.xlu0 %v48, 96
    %v176 = vpop.permute.xlu0 %175
    %v181 = vsel %vm51, %v170, 0.0
    %182 = vadd.xlane.f32.xlu0 %v181
    %v183 = vpop.xlane.xlu0 %182
    %v184 = vsel %vm51, %v172, 0.0
    %185 = vadd.xlane.f32.xlu0 %v184
    %v186 = vpop.xlane.xlu0 %185
    %v187 = vsel %vm51, %v174, 0.0
    %188 = vadd.xlane.f32.xlu0 %v187
    %v189 = vpop.xlane.xlu0 %188
    %v190 = vsel %vm51, %v176, 0.0
    %191 = vadd.xlane.f32.xlu0 %v190
    %v192 = vpop.xlane.xlu0 %191
    %v193 = vmul.f32 %v183, %v70
    %v194 = vmul.f32 %v186, %v70
    %v195 = vmul.f32 %v189, %v70
    %v196 = vmul.f32 %v192, %v70
    %v197 = vsub.f32 %v45, %v193
    %v198 = vsub.f32 %v46, %v194
    %v199 = vsub.f32 %v47, %v195
    %v200 = vsub.f32 %v48, %v196
    %v201 = vmul.f32 %v197, %v197
    %v202 = vmul.f32 %v198, %v198
    %v203 = vmul.f32 %v199, %v199
    %v204 = vmul.f32 %v200, %v200
    %209 = vrot.lane.b32.xlu0 %v201, 96
    %v210 = vpop.permute.xlu0 %209
    %211 = vrot.lane.b32.xlu0 %v202, 96
    %v212 = vpop.permute.xlu0 %211
    %213 = vrot.lane.b32.xlu0 %v203, 96
    %v214 = vpop.permute.xlu0 %213
    %215 = vrot.lane.b32.xlu0 %v204, 96
    %v216 = vpop.permute.xlu0 %215
    %v221 = vsel %vm51, %v210, 0.0
    %222 = vadd.xlane.f32.xlu0 %v221
    %v223 = vpop.xlane.xlu0 %222
    %v224 = vsel %vm51, %v212, 0.0
    %225 = vadd.xlane.f32.xlu0 %v224
    %v226 = vpop.xlane.xlu0 %225
    %v227 = vsel %vm51, %v214, 0.0
    %228 = vadd.xlane.f32.xlu0 %v227
    %v229 = vpop.xlane.xlu0 %228
    %v230 = vsel %vm51, %v216, 0.0
    %231 = vadd.xlane.f32.xlu0 %v230
    %v232 = vpop.xlane.xlu0 %231
    %v233 = vmul.f32 %v223, %v70
    %v234 = vmul.f32 %v226, %v70
    %v235 = vmul.f32 %v229, %v70
    %v236 = vmul.f32 %v232, %v70
    %v237 = vadd.f32 %v233, 1e-06
    %v238 = vadd.f32 %v234, 1e-06
    %v239 = vadd.f32 %v235, 1e-06
    %v240 = vadd.f32 %v236, 1e-06
    %v241 = vrsqrt.pop %v237
    %v242 = vmul.f32 %v241, %v237
    %v243 = vmul.f32 %v242, %v241
    %v244 = vmul.f32 0.5, %v243
    %v245 = vsub.f32 1.5, %v244
    %v246 = vmul.f32 %v241, %v245
    %vm247 = vweird.f32 %v237
    %vm248 = vweird.f32 %v241
    %vm249 = vmor %vm247, %vm248
    %v250 = vsel %vm249, %v241, %v246
    %v251 = vrsqrt.pop %v238
    %v252 = vmul.f32 %v251, %v238
    %v253 = vmul.f32 %v252, %v251
    %v254 = vmul.f32 0.5, %v253
    %v255 = vsub.f32 1.5, %v254
    %v256 = vmul.f32 %v251, %v255
    %vm257 = vweird.f32 %v238
    %vm258 = vweird.f32 %v251
    %vm259 = vmor %vm257, %vm258
    %v260 = vsel %vm259, %v251, %v256
    %v261 = vrsqrt.pop %v239
    %v262 = vmul.f32 %v261, %v239
    %v263 = vmul.f32 %v262, %v261
    %v264 = vmul.f32 0.5, %v263
    %v265 = vsub.f32 1.5, %v264
    %v266 = vmul.f32 %v261, %v265
    %vm267 = vweird.f32 %v239
    %vm268 = vweird.f32 %v261
    %vm269 = vmor %vm267, %vm268
    %v270 = vsel %vm269, %v261, %v266
    %v271 = vrsqrt.pop %v240
    %v272 = vmul.f32 %v271, %v240
    %v273 = vmul.f32 %v272, %v271
    %v274 = vmul.f32 0.5, %v273
    %v275 = vsub.f32 1.5, %v274
    %v276 = vmul.f32 %v271, %v275
    %vm277 = vweird.f32 %v240
    %vm278 = vweird.f32 %v271
    %vm279 = vmor %vm277, %vm278
    %v280 = vsel %vm279, %v271, %v276
    %v281 = vmul.f32 %v250, %v144
    %v282 = vmul.f32 %v260, %v144
    %v283 = vmul.f32 %v270, %v144
    %v284 = vmul.f32 %v280, %v144
    %289 = vrot.lane.b32.xlu0 %v281, 32
    %v290 = vpop.permute.xlu0 %289
    %291 = vrot.lane.b32.xlu0 %v282, 32
    %v292 = vpop.permute.xlu0 %291
    %293 = vrot.lane.b32.xlu0 %v283, 32
    %v294 = vpop.permute.xlu0 %293
    %295 = vrot.lane.b32.xlu0 %v284, 32
    %v296 = vpop.permute.xlu0 %295
    %v301 = vmul.f32 %v197, %v290
    %v302 = vmul.f32 %v198, %v292
    %v303 = vmul.f32 %v199, %v294
    %v304 = vmul.f32 %v200, %v296
    %305 = vrot.lane.b32.xlu0 %v155, 32
    %v306 = vpop.permute.xlu0 %305
    %v308 = vadd.f32 %v301, %v306
    %v309 = vadd.f32 %v302, %v306
    %v310 = vadd.f32 %v303, %v306
    %v311 = vadd.f32 %v304, %v306
    %vm312 = vcmask 523520
    %313 = vst.msk [vmem:[#allocation7] sm:$0xff] %vm312, %v308
    %314 = vst.msk [vmem:[#allocation7 + $0x8] sm:$0xff] %vm312, %v309
    %315 = vst.msk [vmem:[#allocation7 + $0x10] sm:$0xff] %vm312, %v310
    %316 = vst.msk [vmem:[#allocation7 + $0x18] sm:$0xff] %vm312, %v311
    %317 = vrot.lane.b32.xlu0 %v45, 64
    %v318 = vpop.permute.xlu0 %317
    %319 = vrot.lane.b32.xlu0 %v46, 64
    %v320 = vpop.permute.xlu0 %319
    %321 = vrot.lane.b32.xlu0 %v47, 64
    %v322 = vpop.permute.xlu0 %321
    %323 = vrot.lane.b32.xlu0 %v48, 64
    %v324 = vpop.permute.xlu0 %323
    %v329 = vsel %vm51, %v318, 0.0
    %330 = vadd.xlane.f32.xlu0 %v329
    %v331 = vpop.xlane.xlu0 %330
    %v332 = vsel %vm51, %v320, 0.0
    %333 = vadd.xlane.f32.xlu0 %v332
    %v334 = vpop.xlane.xlu0 %333
    %v335 = vsel %vm51, %v322, 0.0
    %336 = vadd.xlane.f32.xlu0 %v335
    %v337 = vpop.xlane.xlu0 %336
    %v338 = vsel %vm51, %v324, 0.0
    %339 = vadd.xlane.f32.xlu0 %v338
    %v340 = vpop.xlane.xlu0 %339
    %v341 = vmul.f32 %v331, %v70
    %v342 = vmul.f32 %v334, %v70
    %v343 = vmul.f32 %v337, %v70
    %v344 = vmul.f32 %v340, %v70
    %v345 = vsub.f32 %v45, %v341
    %v346 = vsub.f32 %v46, %v342
    %v347 = vsub.f32 %v47, %v343
    %v348 = vsub.f32 %v48, %v344
    %v349 = vmul.f32 %v345, %v345
    %v350 = vmul.f32 %v346, %v346
    %v351 = vmul.f32 %v347, %v347
    %v352 = vmul.f32 %v348, %v348
    %357 = vrot.lane.b32.xlu0 %v349, 64
    %v358 = vpop.permute.xlu0 %357
    %359 = vrot.lane.b32.xlu0 %v350, 64
    %v360 = vpop.permute.xlu0 %359
    %361 = vrot.lane.b32.xlu0 %v351, 64
    %v362 = vpop.permute.xlu0 %361
    %363 = vrot.lane.b32.xlu0 %v352, 64
    %v364 = vpop.permute.xlu0 %363
    %v369 = vsel %vm51, %v358, 0.0
    %370 = vadd.xlane.f32.xlu0 %v369
    %v371 = vpop.xlane.xlu0 %370
    %v372 = vsel %vm51, %v360, 0.0
    %373 = vadd.xlane.f32.xlu0 %v372
    %v374 = vpop.xlane.xlu0 %373
    %v375 = vsel %vm51, %v362, 0.0
    %376 = vadd.xlane.f32.xlu0 %v375
    %v377 = vpop.xlane.xlu0 %376
    %v378 = vsel %vm51, %v364, 0.0
    %379 = vadd.xlane.f32.xlu0 %v378
    %v380 = vpop.xlane.xlu0 %379
    %v381 = vmul.f32 %v371, %v70
    %v382 = vmul.f32 %v374, %v70
    %v383 = vmul.f32 %v377, %v70
    %v384 = vmul.f32 %v380, %v70
    %v385 = vadd.f32 %v381, 1e-06
    %v386 = vadd.f32 %v382, 1e-06
    %v387 = vadd.f32 %v383, 1e-06
    %v388 = vadd.f32 %v384, 1e-06
    %v389 = vrsqrt.pop %v385
    %v390 = vmul.f32 %v389, %v385
    %v391 = vmul.f32 %v390, %v389
    %v392 = vmul.f32 0.5, %v391
    %v393 = vsub.f32 1.5, %v392
    %v394 = vmul.f32 %v389, %v393
    %vm395 = vweird.f32 %v385
    %vm396 = vweird.f32 %v389
    %vm397 = vmor %vm395, %vm396
    %v398 = vsel %vm397, %v389, %v394
    %v399 = vrsqrt.pop %v386
    %v400 = vmul.f32 %v399, %v386
    %v401 = vmul.f32 %v400, %v399
    %v402 = vmul.f32 0.5, %v401
    %v403 = vsub.f32 1.5, %v402
    %v404 = vmul.f32 %v399, %v403
    %vm405 = vweird.f32 %v386
    %vm406 = vweird.f32 %v399
    %vm407 = vmor %vm405, %vm406
    %v408 = vsel %vm407, %v399, %v404
    %v409 = vrsqrt.pop %v387
    %v410 = vmul.f32 %v409, %v387
    %v411 = vmul.f32 %v410, %v409
    %v412 = vmul.f32 0.5, %v411
    %v413 = vsub.f32 1.5, %v412
    %v414 = vmul.f32 %v409, %v413
    %vm415 = vweird.f32 %v387
    %vm416 = vweird.f32 %v409
    %vm417 = vmor %vm415, %vm416
    %v418 = vsel %vm417, %v409, %v414
    %v419 = vrsqrt.pop %v388
    %v420 = vmul.f32 %v419, %v388
    %v421 = vmul.f32 %v420, %v419
    %v422 = vmul.f32 0.5, %v421
    %v423 = vsub.f32 1.5, %v422
    %v424 = vmul.f32 %v419, %v423
    %vm425 = vweird.f32 %v388
    %vm426 = vweird.f32 %v419
    %vm427 = vmor %vm425, %vm426
    %v428 = vsel %vm427, %v419, %v424
    %v429 = vmul.f32 %v398, %v144
    %v430 = vmul.f32 %v408, %v144
    %v431 = vmul.f32 %v418, %v144
    %v432 = vmul.f32 %v428, %v144
    %437 = vrot.lane.b32.xlu0 %v429, 64
    %v438 = vpop.permute.xlu0 %437
    %439 = vrot.lane.b32.xlu0 %v430, 64
    %v440 = vpop.permute.xlu0 %439
    %441 = vrot.lane.b32.xlu0 %v431, 64
    %v442 = vpop.permute.xlu0 %441
    %443 = vrot.lane.b32.xlu0 %v432, 64
    %v444 = vpop.permute.xlu0 %443
    %v449 = vmul.f32 %v345, %v438
    %v450 = vmul.f32 %v346, %v440
    %v451 = vmul.f32 %v347, %v442
    %v452 = vmul.f32 %v348, %v444
    %453 = vrot.lane.b32.xlu0 %v155, 64
    %v454 = vpop.permute.xlu0 %453
    %v456 = vadd.f32 %v449, %v454
    %v457 = vadd.f32 %v450, %v454
    %v458 = vadd.f32 %v451, %v454
    %v459 = vadd.f32 %v452, %v454
    %vm460 = vcmask 785920
    %461 = vst.msk [vmem:[#allocation7] sm:$0xff] %vm460, %v456
    %462 = vst.msk [vmem:[#allocation7 + $0x8] sm:$0xff] %vm460, %v457
    %463 = vst.msk [vmem:[#allocation7 + $0x10] sm:$0xff] %vm460, %v458
    %464 = vst.msk [vmem:[#allocation7 + $0x18] sm:$0xff] %vm460, %v459
    %465 = vrot.lane.b32.xlu0 %v45, 32
    %v466 = vpop.permute.xlu0 %465
    %467 = vrot.lane.b32.xlu0 %v46, 32
    %v468 = vpop.permute.xlu0 %467
    %469 = vrot.lane.b32.xlu0 %v47, 32
    %v470 = vpop.permute.xlu0 %469
    %471 = vrot.lane.b32.xlu0 %v48, 32
    %v472 = vpop.permute.xlu0 %471
    %v477 = vsel %vm51, %v466, 0.0
    %478 = vadd.xlane.f32.xlu0 %v477
    %v479 = vpop.xlane.xlu0 %478
    %v480 = vsel %vm51, %v468, 0.0
    %481 = vadd.xlane.f32.xlu0 %v480
    %v482 = vpop.xlane.xlu0 %481
    %v483 = vsel %vm51, %v470, 0.0
    %484 = vadd.xlane.f32.xlu0 %v483
    %v485 = vpop.xlane.xlu0 %484
    %v486 = vsel %vm51, %v472, 0.0
    %487 = vadd.xlane.f32.xlu0 %v486
    %v488 = vpop.xlane.xlu0 %487
    %v489 = vmul.f32 %v479, %v70
    %v490 = vmul.f32 %v482, %v70
    %v491 = vmul.f32 %v485, %v70
    %v492 = vmul.f32 %v488, %v70
    %v493 = vsub.f32 %v45, %v489
    %v494 = vsub.f32 %v46, %v490
    %v495 = vsub.f32 %v47, %v491
    %v496 = vsub.f32 %v48, %v492
    %v497 = vmul.f32 %v493, %v493
    %v498 = vmul.f32 %v494, %v494
    %v499 = vmul.f32 %v495, %v495
    %v500 = vmul.f32 %v496, %v496
    %505 = vrot.lane.b32.xlu0 %v497, 32
    %v506 = vpop.permute.xlu0 %505
    %507 = vrot.lane.b32.xlu0 %v498, 32
    %v508 = vpop.permute.xlu0 %507
    %509 = vrot.lane.b32.xlu0 %v499, 32
    %v510 = vpop.permute.xlu0 %509
    %511 = vrot.lane.b32.xlu0 %v500, 32
    %v512 = vpop.permute.xlu0 %511
    %v517 = vsel %vm51, %v506, 0.0
    %518 = vadd.xlane.f32.xlu0 %v517
    %v519 = vpop.xlane.xlu0 %518
    %v520 = vsel %vm51, %v508, 0.0
    %521 = vadd.xlane.f32.xlu0 %v520
    %v522 = vpop.xlane.xlu0 %521
    %v523 = vsel %vm51, %v510, 0.0
    %524 = vadd.xlane.f32.xlu0 %v523
    %v525 = vpop.xlane.xlu0 %524
    %v526 = vsel %vm51, %v512, 0.0
    %527 = vadd.xlane.f32.xlu0 %v526
    %v528 = vpop.xlane.xlu0 %527
    %v529 = vmul.f32 %v519, %v70
    %v530 = vmul.f32 %v522, %v70
    %v531 = vmul.f32 %v525, %v70
    %v532 = vmul.f32 %v528, %v70
    %v533 = vadd.f32 %v529, 1e-06
    %v534 = vadd.f32 %v530, 1e-06
    %v535 = vadd.f32 %v531, 1e-06
    %v536 = vadd.f32 %v532, 1e-06
    %v537 = vrsqrt.pop %v533
    %v538 = vmul.f32 %v537, %v533
    %v539 = vmul.f32 %v538, %v537
    %v540 = vmul.f32 0.5, %v539
    %v541 = vsub.f32 1.5, %v540
    %v542 = vmul.f32 %v537, %v541
    %vm543 = vweird.f32 %v533
    %vm544 = vweird.f32 %v537
    %vm545 = vmor %vm543, %vm544
    %v546 = vsel %vm545, %v537, %v542
    %v547 = vrsqrt.pop %v534
    %v548 = vmul.f32 %v547, %v534
    %v549 = vmul.f32 %v548, %v547
    %v550 = vmul.f32 0.5, %v549
    %v551 = vsub.f32 1.5, %v550
    %v552 = vmul.f32 %v547, %v551
    %vm553 = vweird.f32 %v534
    %vm554 = vweird.f32 %v547
    %vm555 = vmor %vm553, %vm554
    %v556 = vsel %vm555, %v547, %v552
    %v557 = vrsqrt.pop %v535
    %v558 = vmul.f32 %v557, %v535
    %v559 = vmul.f32 %v558, %v557
    %v560 = vmul.f32 0.5, %v559
    %v561 = vsub.f32 1.5, %v560
    %v562 = vmul.f32 %v557, %v561
    %vm563 = vweird.f32 %v535
    %vm564 = vweird.f32 %v557
    %vm565 = vmor %vm563, %vm564
    %v566 = vsel %vm565, %v557, %v562
    %v567 = vrsqrt.pop %v536
    %v568 = vmul.f32 %v567, %v536
    %v569 = vmul.f32 %v568, %v567
    %v570 = vmul.f32 0.5, %v569
    %v571 = vsub.f32 1.5, %v570
    %v572 = vmul.f32 %v567, %v571
    %vm573 = vweird.f32 %v536
    %vm574 = vweird.f32 %v567
    %vm575 = vmor %vm573, %vm574
    %v576 = vsel %vm575, %v567, %v572
    %v577 = vmul.f32 %v546, %v144
    %v578 = vmul.f32 %v556, %v144
    %v579 = vmul.f32 %v566, %v144
    %v580 = vmul.f32 %v576, %v144
    %585 = vrot.lane.b32.xlu0 %v577, 96
    %v586 = vpop.permute.xlu0 %585
    %587 = vrot.lane.b32.xlu0 %v578, 96
    %v588 = vpop.permute.xlu0 %587
    %589 = vrot.lane.b32.xlu0 %v579, 96
    %v590 = vpop.permute.xlu0 %589
    %591 = vrot.lane.b32.xlu0 %v580, 96
    %v592 = vpop.permute.xlu0 %591
    %v597 = vmul.f32 %v493, %v586
    %v598 = vmul.f32 %v494, %v588
    %v599 = vmul.f32 %v495, %v590
    %v600 = vmul.f32 %v496, %v592
    %601 = vrot.lane.b32.xlu0 %v155, 96
    %v602 = vpop.permute.xlu0 %601
    %v604 = vadd.f32 %v597, %v602
    %v605 = vadd.f32 %v598, %v602
    %v606 = vadd.f32 %v599, %v602
    %v607 = vadd.f32 %v600, %v602
    %vm608 = vcmask 1048320
    %609 = vst.msk [vmem:[#allocation7] sm:$0xff] %vm608, %v604
    %610 = vst.msk [vmem:[#allocation7 + $0x8] sm:$0xff] %vm608, %v605
    %611 = vst.msk [vmem:[#allocation7 + $0x10] sm:$0xff] %vm608, %v606
    %612 = vst.msk [vmem:[#allocation7 + $0x18] sm:$0xff] %vm608, %v607
    // Predicated region
    $region22: #{tpu_custom_call.1} parent=1 // pred_check
      _
    $region23: #{tpu_custom_call.1} parent=1 // pred_check_branch
      %614 = sbr.rel (0) target = $region25
    $region24: #{tpu_custom_call.1} parent=1 // pred_region
      %616 = vsyncadd [#allocation4], 0
      %s617 = sshll.u32 [#allocation7], 4
      %s618 = int_to_ptr.vmem [resolvable:$true] %s617
      %s619 = sshll.u32 %s3, 4
      %s620 = int_to_ptr.hbm [resolvable:$true] %s619
      %625 = dma.vmem_to_hbm [thread:$0]  %s618, 512, %s620, [#allocation4], 128, 128, 8
    $region25: #{tpu_custom_call.1} parent=1 // pred_fallthru
      _
    // Predicated region
    $region26: #{tpu_custom_call.1} parent=1 // pred_check
      _
    $region27: #{tpu_custom_call.1} parent=1 // pred_check_branch
      %627 = sbr.rel (0) target = $region29
    $region28: #{tpu_custom_call.1} parent=1 // pred_region
      %629 = dma.done [#allocation4], 512
    $region29: #{tpu_custom_call.1} parent=1 // pred_fallthru
      _
    %630 = vsyncpa [#allocation3], 1
    %631 = vsyncpa [#allocation6], 1
    %632 = vsyncpa [#allocation4], 1

</llo_original>
